<compile_context>
chip_gen: v6e
topology: v6e:2x2x1
jax: 0.10.0
libtpu: 0.0.40
codegen_flags: <defaults>
</compile_context>

<pallas_src>
import functools

import jax
import jax.numpy as jnp
from jax.experimental import pallas as pl
from jax.experimental.pallas import tpu as pltpu


LANE = 128      # vreg lane width: keep every matmul/store dimension lane-dense
SUBLANE = 8     # f32 sublane packing


def _round_up(x, m):
    return (x + m - 1) // m * m


def _pad2d(a, rows, cols):
    pr, pc = rows - a.shape[0], cols - a.shape[1]
    return a if (pr == 0 and pc == 0) else jnp.pad(a, ((0, pr), (0, pc)))


@functools.lru_cache(maxsize=1)
def _tpu_hw_info():
    """Best-effort (vmem_bytes_per_core, tensorcores_per_device); conservative fallback."""
    vmem = None
    try:
        vmem = int(pltpu.get_tpu_info().vmem_capacity_bytes)
    except Exception:
        vmem = None
    kind = ""
    try:
        kind = jax.devices()[0].device_kind.lower()
    except Exception:
        pass
    is_v7 = "v7" in kind
    megacore = is_v7 or "v4" in kind or "v5p" in kind
    cores = 2 if megacore else 1
    if vmem is None:
        vmem = (64 << 20) if is_v7 else (128 << 20)
    return vmem, cores


def _vmem_need_bytes(tm, dp, x_bytes, c_bytes, out_bytes):
    """Honest per-core VMEM estimate for one grid config."""
    d0p, d1p, d2p, d3p = dp
    # Resident weights/biases (constant index_map): default pipeline still allocates
    # two buffers each — counted as such.
    weights = 2 * ((d0p * d1p + d1p * d2p + d2p * d3p) * c_bytes
                   + (d1p + d2p + d3p) * 4)
    # Streamed, double-buffered x / out tiles.
    stream = 2 * tm * (d0p * x_bytes + d3p * out_bytes)
    # In-kernel live intermediates: f32 activations + bf16 cast copies.
    inter = tm * ((d1p + d2p + d3p) * 4 + (d0p + d1p + d2p) * c_bytes)
    return weights + stream + inter


def _choose_tile_m(B, num_cores, fits_vmem):
    """Streamed M tile: large (amortize ~0.35us/step, long DMAs) but >=2 steps/core."""
    if B < 64:
        return _round_up(max(B, 1), SUBLANE)       # tiny-batch path (prod -> XLA)
    min_steps = 2 * max(num_cores, 1)
    candidates = [1024, 512, 256, 128, 64, 32, 16, 8]
    for tm in candidates:                          # best: fits VMEM, tm | B, >= min_steps
        if fits_vmem(tm) and B % tm == 0 and B // tm >= min_steps:
            return tm
    for tm in candidates:                          # next: fits, >= min_steps (pad last tile)
        if fits_vmem(tm) and pl.cdiv(B, tm) >= min_steps:
            return tm
    for tm in candidates:                          # fallback: biggest that fits VMEM
        if fits_vmem(tm):
            return tm
    return SUBLANE


def _encoder_kernel(x_ref, w1_ref, b1_ref, w2_ref, b2_ref, w3_ref, b3_ref,
                    o_ref, *, compute_dtype):
    """One batch tile: 3x (bf16 MXU matmul -> f32 bias-add -> ReLU); bf16 store."""
    x = x_ref[...].astype(compute_dtype)           # x may arrive f32; cast in-kernel
    h = jnp.dot(x, w1_ref[...], preferred_element_type=jnp.float32)
    h = jnp.maximum(h + b1_ref[...], 0.0)

    h = jnp.dot(h.astype(compute_dtype), w2_ref[...],
                preferred_element_type=jnp.float32)
    h = jnp.maximum(h + b2_ref[...], 0.0)

    h = jnp.dot(h.astype(compute_dtype), w3_ref[...],
                preferred_element_type=jnp.float32)
    h = jnp.maximum(h + b3_ref[...], 0.0)

    o_ref[...] = h.astype(o_ref.dtype)


def init_encoder_params(key, in_seq_len, out_seq_len, d_model, dtype=jnp.float32):
    """PyTorch-Linear-style init (uniform +-1/sqrt(fan_in)); W stored as (in, out)."""
    input_dims = in_seq_len * d_model
    output_dims = out_seq_len * d_model
    dims_1 = (input_dims - output_dims) // 4 * 3
    dims_2 = (input_dims - output_dims) // 4 * 2

    dims = [(input_dims, dims_1), (dims_1, dims_2), (dims_2, output_dims)]
    keys = jax.random.split(key, 2 * len(dims))
    params = []
    for li, (fan_in, fan_out) in enumerate(dims):
        bound = 1.0 / (fan_in ** 0.5)
        w = jax.random.uniform(keys[2 * li], (fan_in, fan_out), dtype,
                               minval=-bound, maxval=bound)
        b = jax.random.uniform(keys[2 * li + 1], (1, fan_out), dtype,
                               minval=-bound, maxval=bound)
        params.append((w, b))
    return params


@functools.partial(jax.jit, static_argnames=("out_seq_len", "d_model",
                                             "compute_dtype", "force_pallas"))
def encoder_forward(x, params, *, out_seq_len, d_model,
                    compute_dtype=jnp.bfloat16, force_pallas=None):
    """Encoder forward (inference semantics). Returns (B, out_seq_len, d_model) bf16."""
    B = x.shape[0]
    x_flat = x.reshape(B, -1)                                  # nn.Flatten()

    (w1, b1), (w2, b2), (w3, b3) = params
    d0, d1, d2, d3 = w1.shape[0], w1.shape[1], w2.shape[1], w3.shape[1]
    assert x_flat.shape[1] == d0

    use_pallas = force_pallas if force_pallas is not None else (B >= 64)
    if not use_pallas:
        # Tiny batch: the three GEMMs under-fill the MXU and pallas_call fixed
        # overhead dominates — let XLA handle it with identical numerics.
        h = x_flat
        for w, b in params:
            h = jnp.dot(h.astype(compute_dtype), w.astype(compute_dtype),
                        preferred_element_type=jnp.float32)
            h = jnp.maximum(h + b.astype(jnp.float32), 0.0)
        return h.astype(compute_dtype).reshape(B, out_seq_len, d_model)

    # Lane-dense layer widths. Zero-padding W_i columns / b_i and the matching rows
    # of W_{i+1} is exact: padded lanes stay 0 through ReLU.
    d0p, d1p, d2p, d3p = (_round_up(d, LANE) for d in (d0, d1, d2, d3))
    c_bytes = jnp.dtype(compute_dtype).itemsize
    out_dtype = compute_dtype                       # bf16 out: halves output HBM bytes
    out_bytes = jnp.dtype(out_dtype).itemsize

    vmem_phys, num_cores = _tpu_hw_info()
    vmem_cap = (vmem_phys * 7) // 8                 # headroom below physical/scoped VMEM
    fits = lambda tm: _vmem_need_bytes(tm, (d0p, d1p, d2p, d3p),
                                       4, c_bytes, out_bytes) <= vmem_cap
    tm = _choose_tile_m(B, num_cores, fits)
    bp = _round_up(B, tm)
    grid = (bp // tm,)

    # Stream x directly (f32, cast in-kernel) unless padding forces a copy anyway;
    # this avoids a separate wrapper-side HBM pass over the largest tensor.
    if bp == B and d0p == d0:
        xp = x_flat
    else:
        xp = _pad2d(x_flat, bp, d0p).astype(compute_dtype)
    x_bytes = jnp.dtype(xp.dtype).itemsize

    w1p = _pad2d(w1, d0p, d1p).astype(compute_dtype)
    w2p = _pad2d(w2, d1p, d2p).astype(compute_dtype)
    w3p = _pad2d(w3, d2p, d3p).astype(compute_dtype)
    b1p = _pad2d(b1, 1, d1p).astype(jnp.float32)
    b2p = _pad2d(b2, 1, d2p).astype(jnp.float32)
    b3p = _pad2d(b3, 1, d3p).astype(jnp.float32)

    def resident(shape):
        # Constant block index -> weight/bias is DMA'd once and stays VMEM-resident.
        return pl.BlockSpec(shape, lambda i: (0, 0))

    flops = 2 * bp * (d0p * d1p + d1p * d2p + d2p * d3p)
    bytes_accessed = ((d0p * d1p + d1p * d2p + d2p * d3p) * c_bytes
                      + (d1p + d2p + d3p) * 4
                      + bp * d0p * x_bytes + bp * d3p * out_bytes)

    need = _vmem_need_bytes(tm, (d0p, d1p, d2p, d3p), x_bytes, c_bytes, out_bytes)
    vmem_limit = int(min(vmem_cap, need + need // 4 + (4 << 20)))

    out_flat = pl.pallas_call(
        functools.partial(_encoder_kernel, compute_dtype=compute_dtype),
        grid=grid,
        in_specs=[
            pl.BlockSpec((tm, d0p), lambda i: (i, 0)),   # streamed batch tile
            resident((d0p, d1p)), resident((1, d1p)),
            resident((d1p, d2p)), resident((1, d2p)),
            resident((d2p, d3p)), resident((1, d3p)),
        ],
        out_specs=pl.BlockSpec((tm, d3p), lambda i: (i, 0)),
        out_shape=jax.ShapeDtypeStruct((bp, d3p), out_dtype),
        compiler_params=pltpu.CompilerParams(
            dimension_semantics=("parallel",),
            vmem_limit_bytes=vmem_limit),
        cost_estimate=pl.CostEstimate(
            flops=int(flops), transcendentals=0,
            bytes_accessed=int(bytes_accessed)),
    )(xp, w1p, b1p, w2p, b2p, w3p, b3p)

    out = out_flat if (bp == B and d3p == d3) else out_flat[:B, :d3]
    return out.reshape(B, out_seq_len, d_model)     # nn.Unflatten(1, (S_out, D))


def reference_forward(x, params, compute_dtype=jnp.float32):
    """Pure-JAX reference; optionally mimics the kernel's matmul input dtype."""
    h = x.reshape(x.shape[0], -1)
    for w, b in params:
        h = jnp.dot(h.astype(compute_dtype), w.astype(compute_dtype),
                    preferred_element_type=jnp.float32) + b
        h = jnp.maximum(h, 0.0)
    return h


if __name__ == "__main__":
    # Shapes consistent with the module: input_dims=512, dims_1=192 (padded to 256
    # in-kernel), dims_2=128, output_dims=256.
    in_seq_len, out_seq_len, d_model = 16, 8, 32

    key = jax.random.PRNGKey(0)
    kx, kp = jax.random.split(key)
    params = init_encoder_params(kp, in_seq_len, out_seq_len, d_model)

    def run_and_check(batch, force_pallas):
        x = jax.random.normal(jax.random.fold_in(kx, batch),
                              (batch, in_seq_len, d_model), jnp.float32)
        out = encoder_forward(x, params, out_seq_len=out_seq_len, d_model=d_model,
                              force_pallas=force_pallas)
        out = jax.block_until_ready(out)
        assert out.shape == (batch, out_seq_len, d_model)
        out32 = out.astype(jnp.float32)

        # Same-precision reference (bf16 matmul inputs, f32 accumulation).
        ref_bf16 = reference_forward(x, params, jnp.bfloat16).reshape(out.shape)
        assert jnp.allclose(out32, ref_bf16, atol=1e-2, rtol=1e-2), \
            f"bf16-matched reference mismatch at batch={batch}"

        # Full-f32 reference (PyTorch forward semantics): bounds bf16 rounding error.
        ref_f32 = reference_forward(x, params, jnp.float32).reshape(out.shape)
        assert jnp.allclose(out32, ref_f32, atol=6e-2, rtol=6e-2), \
            f"f32 reference mismatch at batch={batch}"

    # Small demo shapes, forced through the Pallas path to exercise the kernel.
    run_and_check(batch=2, force_pallas=True)
    # Moderate batch: exercises the tuned tile / multi-step grid / no-pad streaming path.
    run_and_check(batch=256, force_pallas=None)

    print("KERNEL_OK")
</pallas_src>

<mosaic_0001>
module attributes {stable_mosaic.version = 11 : i64} {
  func.func @_encoder_kernel(%arg0: i32, %arg1: memref<8x512xbf16, #tpu.memory_space<vmem>>, %arg2: memref<512x256xbf16, #tpu.memory_space<vmem>>, %arg3: memref<1x256xf32, #tpu.memory_space<vmem>>, %arg4: memref<256x128xbf16, #tpu.memory_space<vmem>>, %arg5: memref<1x128xf32, #tpu.memory_space<vmem>>, %arg6: memref<128x256xbf16, #tpu.memory_space<vmem>>, %arg7: memref<1x256xf32, #tpu.memory_space<vmem>>, %arg8: memref<8x256xbf16, #tpu.memory_space<vmem>>) attributes {dimension_semantics = [#tpu.dimension_semantics<parallel>], iteration_bounds = array<i64: 1>, scalar_prefetch = 0 : i64, scratch_operands = 0 : i64, tpu.core_type = #tpu.core_type<tc>, window_params = [{transform_indices = @transform_0, window_bounds = array<i64: 8, 512>}, {pipeline_mode = #tpu.pipeline_mode<synchronous>, transform_indices = @transform_1, window_bounds = array<i64: 512, 256>}, {pipeline_mode = #tpu.pipeline_mode<synchronous>, transform_indices = @transform_2, window_bounds = array<i64: 1, 256>}, {pipeline_mode = #tpu.pipeline_mode<synchronous>, transform_indices = @transform_3, window_bounds = array<i64: 256, 128>}, {pipeline_mode = #tpu.pipeline_mode<synchronous>, transform_indices = @transform_4, window_bounds = array<i64: 1, 128>}, {pipeline_mode = #tpu.pipeline_mode<synchronous>, transform_indices = @transform_5, window_bounds = array<i64: 128, 256>}, {pipeline_mode = #tpu.pipeline_mode<synchronous>, transform_indices = @transform_6, window_bounds = array<i64: 1, 256>}, {transform_indices = @transform_7, window_bounds = array<i64: 8, 256>}]} {
    %c0 = arith.constant 0 : index
    %c0_0 = arith.constant 0 : index
    %0 = vector.load %arg1[%c0, %c0_0] : memref<8x512xbf16, #tpu.memory_space<vmem>>, vector<8x512xbf16>
    %c0_1 = arith.constant 0 : index
    %c0_2 = arith.constant 0 : index
    %1 = vector.load %arg2[%c0_1, %c0_2] : memref<512x256xbf16, #tpu.memory_space<vmem>>, vector<512x256xbf16>
    %cst = arith.constant dense<0.000000e+00> : vector<8x256xf32>
    %2 = tpu.matmul %0, %1, %cst {dimension_numbers = #tpu.dot_dimension_numbers<[1], [0], [0], [1], [0, 0, 1, 1], [], []>} : vector<8x512xbf16>, vector<512x256xbf16>, vector<8x256xf32> -> vector<8x256xf32>
    %c0_3 = arith.constant 0 : index
    %c0_4 = arith.constant 0 : index
    %3 = vector.load %arg3[%c0_3, %c0_4] : memref<1x256xf32, #tpu.memory_space<vmem>>, vector<1x256xf32>
    %4 = vector.broadcast %3 : vector<1x256xf32> to vector<8x256xf32>
    %5 = arith.addf %2, %4 : vector<8x256xf32>
    %cst_5 = arith.constant 0.000000e+00 : f32
    %6 = vector.broadcast %cst_5 : f32 to vector<8x256xf32>
    %7 = arith.maximumf %5, %6 : vector<8x256xf32>
    %8 = arith.truncf %7 : vector<8x256xf32> to vector<8x256xbf16>
    %c0_6 = arith.constant 0 : index
    %c0_7 = arith.constant 0 : index
    %9 = vector.load %arg4[%c0_6, %c0_7] : memref<256x128xbf16, #tpu.memory_space<vmem>>, vector<256x128xbf16>
    %cst_8 = arith.constant dense<0.000000e+00> : vector<8x128xf32>
    %10 = tpu.matmul %8, %9, %cst_8 {dimension_numbers = #tpu.dot_dimension_numbers<[1], [0], [0], [1], [0, 0, 1, 1], [], []>} : vector<8x256xbf16>, vector<256x128xbf16>, vector<8x128xf32> -> vector<8x128xf32>
    %c0_9 = arith.constant 0 : index
    %c0_10 = arith.constant 0 : index
    %11 = vector.load %arg5[%c0_9, %c0_10] : memref<1x128xf32, #tpu.memory_space<vmem>>, vector<1x128xf32>
    %12 = vector.broadcast %11 : vector<1x128xf32> to vector<8x128xf32>
    %13 = arith.addf %10, %12 : vector<8x128xf32>
    %cst_11 = arith.constant 0.000000e+00 : f32
    %14 = vector.broadcast %cst_11 : f32 to vector<8x128xf32>
    %15 = arith.maximumf %13, %14 : vector<8x128xf32>
    %16 = arith.truncf %15 : vector<8x128xf32> to vector<8x128xbf16>
    %c0_12 = arith.constant 0 : index
    %c0_13 = arith.constant 0 : index
    %17 = vector.load %arg6[%c0_12, %c0_13] : memref<128x256xbf16, #tpu.memory_space<vmem>>, vector<128x256xbf16>
    %cst_14 = arith.constant dense<0.000000e+00> : vector<8x256xf32>
    %18 = tpu.matmul %16, %17, %cst_14 {dimension_numbers = #tpu.dot_dimension_numbers<[1], [0], [0], [1], [0, 0, 1, 1], [], []>} : vector<8x128xbf16>, vector<128x256xbf16>, vector<8x256xf32> -> vector<8x256xf32>
    %c0_15 = arith.constant 0 : index
    %c0_16 = arith.constant 0 : index
    %19 = vector.load %arg7[%c0_15, %c0_16] : memref<1x256xf32, #tpu.memory_space<vmem>>, vector<1x256xf32>
    %20 = vector.broadcast %19 : vector<1x256xf32> to vector<8x256xf32>
    %21 = arith.addf %18, %20 : vector<8x256xf32>
    %cst_17 = arith.constant 0.000000e+00 : f32
    %22 = vector.broadcast %cst_17 : f32 to vector<8x256xf32>
    %23 = arith.maximumf %21, %22 : vector<8x256xf32>
    %24 = arith.truncf %23 : vector<8x256xf32> to vector<8x256xbf16>
    %c0_18 = arith.constant 0 : index
    %c0_19 = arith.constant 0 : index
    %25 = vector.load %arg8[%c0_18, %c0_19] : memref<8x256xbf16, #tpu.memory_space<vmem>>, vector<8x256xbf16>
    tpu.vector_store %arg8[%c0_18, %c0_19], %24 {strides = array<i32>} : memref<8x256xbf16, #tpu.memory_space<vmem>>, vector<8x256xbf16>,
    return
  }
  func.func @transform_0(%arg0: i32) -> (i32, i32) {
    %c0_i32 = arith.constant 0 : i32
    %c0_i32_0 = arith.constant 0 : i32
    return %arg0, %c0_i32 : i32, i32
  }
  func.func @transform_1(%arg0: i32) -> (i32, i32) {
    %c0_i32 = arith.constant 0 : i32
    %c0_i32_0 = arith.constant 0 : i32
    %c0_i32_1 = arith.constant 0 : i32
    return %c0_i32, %c0_i32_0 : i32, i32
  }
  func.func @transform_2(%arg0: i32) -> (i32, i32) {
    %c0_i32 = arith.constant 0 : i32
    %c0_i32_0 = arith.constant 0 : i32
    %c0_i32_1 = arith.constant 0 : i32
    return %c0_i32, %c0_i32_0 : i32, i32
  }
  func.func @transform_3(%arg0: i32) -> (i32, i32) {
    %c0_i32 = arith.constant 0 : i32
    %c0_i32_0 = arith.constant 0 : i32
    %c0_i32_1 = arith.constant 0 : i32
    return %c0_i32, %c0_i32_0 : i32, i32
  }
  func.func @transform_4(%arg0: i32) -> (i32, i32) {
    %c0_i32 = arith.constant 0 : i32
    %c0_i32_0 = arith.constant 0 : i32
    %c0_i32_1 = arith.constant 0 : i32
    return %c0_i32, %c0_i32_0 : i32, i32
  }
  func.func @transform_5(%arg0: i32) -> (i32, i32) {
    %c0_i32 = arith.constant 0 : i32
    %c0_i32_0 = arith.constant 0 : i32
    %c0_i32_1 = arith.constant 0 : i32
    return %c0_i32, %c0_i32_0 : i32, i32
  }
  func.func @transform_6(%arg0: i32) -> (i32, i32) {
    %c0_i32 = arith.constant 0 : i32
    %c0_i32_0 = arith.constant 0 : i32
    %c0_i32_1 = arith.constant 0 : i32
    return %c0_i32, %c0_i32_0 : i32, i32
  }
  func.func @transform_7(%arg0: i32) -> (i32, i32) {
    %c0_i32 = arith.constant 0 : i32
    %c0_i32_0 = arith.constant 0 : i32
    return %arg0, %c0_i32 : i32, i32
  }
}

</mosaic_0001>

<llo_original>
// kernel: encoder_forward.1
$region0: #{encoder_forward.1}
  #allocation0 [shape = 'u32[]', space=smem, size = 0x4, offset = 0x4, fixed_abs, tag = 'smem constant byte address 0x4 - core index']
  #allocation1 [shape = 'u32[144,128]{1,0:T(1,128)}', space=vmem, size = 0x12000, scoped, tag = 'internal scratch']
  %s0 = inlined_call_operand.vmem [shape: bf16[8,512], index: 0, kind: input, shape index: {}]
  %s1 = inlined_call_operand.vmem [shape: bf16[512,256], index: 1, kind: input, shape index: {}]
  %s2 = inlined_call_operand.vmem [shape: f32[1,256], index: 2, kind: input, shape index: {}]
  %s3 = inlined_call_operand.vmem [shape: bf16[256,128], index: 3, kind: input, shape index: {}]
  %s4 = inlined_call_operand.vmem [shape: f32[1,128], index: 4, kind: input, shape index: {}]
  %s5 = inlined_call_operand.vmem [shape: bf16[128,256], index: 5, kind: input, shape index: {}]
  %s6 = inlined_call_operand.vmem [shape: f32[1,256], index: 6, kind: input, shape index: {}]
  %s7 = inlined_call_operand.vmem [shape: bf16[8,256], index: 7, kind: output, shape index: {}]
  %s8 = sld [smem:[#allocation0]]
  $region38: #{encoder_forward.1} parent=0
    _
  %s10 = ssub.s32 1, %s8
  %s11 = scalar_select 0, %s10, %s8
  // Predicated region
  $region2: #{encoder_forward.1} parent=0 // pred_check
    _
  $region3: #{encoder_forward.1} parent=0 // pred_check_branch
    %13 = sbr.rel (0) target = $region5
  $region4: #{encoder_forward.1} parent=0 // pred_region
    _
  $region5: #{encoder_forward.1} parent=0 // pred_fallthru
    _
  // Predicated region
  $region6: #{encoder_forward.1} parent=0 // pred_check
    _
  $region7: #{encoder_forward.1} parent=0 // pred_check_branch
    %15 = sbr.rel (0) target = $region9
  $region8: #{encoder_forward.1} parent=0 // pred_region
    _
  $region9: #{encoder_forward.1} parent=0 // pred_fallthru
    _
  // Predicated region
  $region10: #{encoder_forward.1} parent=0 // pred_check
    _
  $region11: #{encoder_forward.1} parent=0 // pred_check_branch
    %17 = sbr.rel (0) target = $region13
  $region12: #{encoder_forward.1} parent=0 // pred_region
    _
  $region13: #{encoder_forward.1} parent=0 // pred_fallthru
    _
  // Predicated region
  $region14: #{encoder_forward.1} parent=0 // pred_check
    _
  $region15: #{encoder_forward.1} parent=0 // pred_check_branch
    %19 = sbr.rel (0) target = $region17
  $region16: #{encoder_forward.1} parent=0 // pred_region
    _
  $region17: #{encoder_forward.1} parent=0 // pred_fallthru
    _
  // Predicated region
  $region18: #{encoder_forward.1} parent=0 // pred_check
    _
  $region19: #{encoder_forward.1} parent=0 // pred_check_branch
    %21 = sbr.rel (0) target = $region21
  $region20: #{encoder_forward.1} parent=0 // pred_region
    _
  $region21: #{encoder_forward.1} parent=0 // pred_fallthru
    _
  // Predicated region
  $region22: #{encoder_forward.1} parent=0 // pred_check
    _
  $region23: #{encoder_forward.1} parent=0 // pred_check_branch
    %23 = sbr.rel (0) target = $region25
  $region24: #{encoder_forward.1} parent=0 // pred_region
    _
  $region25: #{encoder_forward.1} parent=0 // pred_fallthru
    _
  // Predicated region
  $region26: #{encoder_forward.1} parent=0 // pred_check
    _
  $region27: #{encoder_forward.1} parent=0 // pred_check_branch
    %25 = sbr.rel (0) target = $region29
  $region28: #{encoder_forward.1} parent=0 // pred_region
    _
  $region29: #{encoder_forward.1} parent=0 // pred_fallthru
    _
  %v27 = vld [vmem:[%s0] sm:$0xff]
  %v28 = vld [vmem:[%s0 + $0x8] sm:$0xff]
  %v29 = vld [vmem:[%s1] sm:$0xff]
  %v30 = vld [vmem:[%s1 + $0x8] sm:$0xff]
  %v31 = vld [vmem:[%s1 + $0x10] sm:$0xff]
  %v32 = vld [vmem:[%s1 + $0x18] sm:$0xff]
  %v33 = vld [vmem:[%s1 + $0x20] sm:$0xff]
  %v34 = vld [vmem:[%s1 + $0x28] sm:$0xff]
  %v35 = vld [vmem:[%s1 + $0x30] sm:$0xff]
  %v36 = vld [vmem:[%s1 + $0x38] sm:$0xff]
  %v37 = vld [vmem:[%s1 + $0x40] sm:$0xff]
  %v38 = vld [vmem:[%s1 + $0x48] sm:$0xff]
  %v39 = vld [vmem:[%s1 + $0x50] sm:$0xff]
  %v40 = vld [vmem:[%s1 + $0x58] sm:$0xff]
  %v41 = vld [vmem:[%s1 + $0x60] sm:$0xff]
  %v42 = vld [vmem:[%s1 + $0x68] sm:$0xff]
  %v43 = vld [vmem:[%s1 + $0x70] sm:$0xff]
  %v44 = vld [vmem:[%s1 + $0x78] sm:$0xff]
  %v45 = vld [vmem:[%s1 + $0x80] sm:$0xff]
  %v46 = vld [vmem:[%s1 + $0x88] sm:$0xff]
  %v47 = vld [vmem:[%s1 + $0x90] sm:$0xff]
  %v48 = vld [vmem:[%s1 + $0x98] sm:$0xff]
  %v49 = vld [vmem:[%s1 + $0xa0] sm:$0xff]
  %v50 = vld [vmem:[%s1 + $0xa8] sm:$0xff]
  %v51 = vld [vmem:[%s1 + $0xb0] sm:$0xff]
  %v52 = vld [vmem:[%s1 + $0xb8] sm:$0xff]
  %v53 = vld [vmem:[%s1 + $0xc0] sm:$0xff]
  %v54 = vld [vmem:[%s1 + $0xc8] sm:$0xff]
  %v55 = vld [vmem:[%s1 + $0xd0] sm:$0xff]
  %v56 = vld [vmem:[%s1 + $0xd8] sm:$0xff]
  %v57 = vld [vmem:[%s1 + $0xe0] sm:$0xff]
  %v58 = vld [vmem:[%s1 + $0xe8] sm:$0xff]
  %v59 = vld [vmem:[%s1 + $0xf0] sm:$0xff]
  %v60 = vld [vmem:[%s1 + $0xf8] sm:$0xff]
  %v61 = vld [vmem:[%s1 + $0x100] sm:$0xff]
  %v62 = vld [vmem:[%s1 + $0x108] sm:$0xff]
  %v63 = vld [vmem:[%s1 + $0x110] sm:$0xff]
  %v64 = vld [vmem:[%s1 + $0x118] sm:$0xff]
  %v65 = vld [vmem:[%s1 + $0x120] sm:$0xff]
  %v66 = vld [vmem:[%s1 + $0x128] sm:$0xff]
  %v67 = vld [vmem:[%s1 + $0x130] sm:$0xff]
  %v68 = vld [vmem:[%s1 + $0x138] sm:$0xff]
  %v69 = vld [vmem:[%s1 + $0x140] sm:$0xff]
  %v70 = vld [vmem:[%s1 + $0x148] sm:$0xff]
  %v71 = vld [vmem:[%s1 + $0x150] sm:$0xff]
  %v72 = vld [vmem:[%s1 + $0x158] sm:$0xff]
  %v73 = vld [vmem:[%s1 + $0x160] sm:$0xff]
  %v74 = vld [vmem:[%s1 + $0x168] sm:$0xff]
  %v75 = vld [vmem:[%s1 + $0x170] sm:$0xff]
  %v76 = vld [vmem:[%s1 + $0x178] sm:$0xff]
  %v77 = vld [vmem:[%s1 + $0x180] sm:$0xff]
  %v78 = vld [vmem:[%s1 + $0x188] sm:$0xff]
  %v79 = vld [vmem:[%s1 + $0x190] sm:$0xff]
  %v80 = vld [vmem:[%s1 + $0x198] sm:$0xff]
  %v81 = vld [vmem:[%s1 + $0x1a0] sm:$0xff]
  %v82 = vld [vmem:[%s1 + $0x1a8] sm:$0xff]
  %v83 = vld [vmem:[%s1 + $0x1b0] sm:$0xff]
  %v84 = vld [vmem:[%s1 + $0x1b8] sm:$0xff]
  %v85 = vld [vmem:[%s1 + $0x1c0] sm:$0xff]
  %v86 = vld [vmem:[%s1 + $0x1c8] sm:$0xff]
  %v87 = vld [vmem:[%s1 + $0x1d0] sm:$0xff]
  %v88 = vld [vmem:[%s1 + $0x1d8] sm:$0xff]
  %v89 = vld [vmem:[%s1 + $0x1e0] sm:$0xff]
  %v90 = vld [vmem:[%s1 + $0x1e8] sm:$0xff]
  %v91 = vld [vmem:[%s1 + $0x1f0] sm:$0xff]
  %v92 = vld [vmem:[%s1 + $0x1f8] sm:$0xff]
  %v93 = vld [vmem:[%s2] sm:$0x3]
  %v95 = vlaneseq
  %v96 = vshrl.u32 %v95, 7
  %v97 = vsub.s32 0, %v96
  %v98 = vrot.slane %v93, %v97
  %v99 = vlaneseq
  %v100 = vshrl.u32 %v99, 7
  %v101 = vsub.s32 1, %v100
  %v102 = vrot.slane %v93, %v101
  %v107 = vunpack.c.l.b16 %v27
  %v108 = vunpack.c.h.b16 %v27
  %v109 = vunpack.c.l.b16 %v28
  %v110 = vunpack.c.h.b16 %v28
  %v111 = vpack.c.b16 %v107, %v107
  %v112 = vpack.c.b16 %v108, %v108
  %v113 = vpack.c.b16 %v109, %v109
  %v114 = vpack.c.b16 %v110, %v110
  %v183 = vunpack.c.l.b16 %v29
  %v184 = vunpack.c.h.b16 %v29
  %v185 = vunpack.c.l.b16 %v30
  %v186 = vunpack.c.h.b16 %v30
  %v187 = vunpack.c.l.b16 %v31
  %v188 = vunpack.c.h.b16 %v31
  %v189 = vunpack.c.l.b16 %v32
  %v190 = vunpack.c.h.b16 %v32
  %v191 = vunpack.c.l.b16 %v33
  %v192 = vunpack.c.h.b16 %v33
  %v193 = vunpack.c.l.b16 %v34
  %v194 = vunpack.c.h.b16 %v34
  %v195 = vunpack.c.l.b16 %v35
  %v196 = vunpack.c.h.b16 %v35
  %v197 = vunpack.c.l.b16 %v36
  %v198 = vunpack.c.h.b16 %v36
  %v199 = vunpack.c.l.b16 %v37
  %v200 = vunpack.c.h.b16 %v37
  %v201 = vunpack.c.l.b16 %v38
  %v202 = vunpack.c.h.b16 %v38
  %v203 = vunpack.c.l.b16 %v39
  %v204 = vunpack.c.h.b16 %v39
  %v205 = vunpack.c.l.b16 %v40
  %v206 = vunpack.c.h.b16 %v40
  %v207 = vunpack.c.l.b16 %v41
  %v208 = vunpack.c.h.b16 %v41
  %v209 = vunpack.c.l.b16 %v42
  %v210 = vunpack.c.h.b16 %v42
  %v211 = vunpack.c.l.b16 %v43
  %v212 = vunpack.c.h.b16 %v43
  %v213 = vunpack.c.l.b16 %v44
  %v214 = vunpack.c.h.b16 %v44
  %v215 = vunpack.c.l.b16 %v45
  %v216 = vunpack.c.h.b16 %v45
  %v217 = vunpack.c.l.b16 %v46
  %v218 = vunpack.c.h.b16 %v46
  %v219 = vunpack.c.l.b16 %v47
  %v220 = vunpack.c.h.b16 %v47
  %v221 = vunpack.c.l.b16 %v48
  %v222 = vunpack.c.h.b16 %v48
  %v223 = vunpack.c.l.b16 %v49
  %v224 = vunpack.c.h.b16 %v49
  %v225 = vunpack.c.l.b16 %v50
  %v226 = vunpack.c.h.b16 %v50
  %v227 = vunpack.c.l.b16 %v51
  %v228 = vunpack.c.h.b16 %v51
  %v229 = vunpack.c.l.b16 %v52
  %v230 = vunpack.c.h.b16 %v52
  %v231 = vunpack.c.l.b16 %v53
  %v232 = vunpack.c.h.b16 %v53
  %v233 = vunpack.c.l.b16 %v54
  %v234 = vunpack.c.h.b16 %v54
  %v235 = vunpack.c.l.b16 %v55
  %v236 = vunpack.c.h.b16 %v55
  %v237 = vunpack.c.l.b16 %v56
  %v238 = vunpack.c.h.b16 %v56
  %v239 = vunpack.c.l.b16 %v57
  %v240 = vunpack.c.h.b16 %v57
  %v241 = vunpack.c.l.b16 %v58
  %v242 = vunpack.c.h.b16 %v58
  %v243 = vunpack.c.l.b16 %v59
  %v244 = vunpack.c.h.b16 %v59
  %v245 = vunpack.c.l.b16 %v60
  %v246 = vunpack.c.h.b16 %v60
  %v247 = vunpack.c.l.b16 %v61
  %v248 = vunpack.c.h.b16 %v61
  %v249 = vunpack.c.l.b16 %v62
  %v250 = vunpack.c.h.b16 %v62
  %v251 = vunpack.c.l.b16 %v63
  %v252 = vunpack.c.h.b16 %v63
  %v253 = vunpack.c.l.b16 %v64
  %v254 = vunpack.c.h.b16 %v64
  %v255 = vunpack.c.l.b16 %v65
  %v256 = vunpack.c.h.b16 %v65
  %v257 = vunpack.c.l.b16 %v66
  %v258 = vunpack.c.h.b16 %v66
  %v259 = vunpack.c.l.b16 %v67
  %v260 = vunpack.c.h.b16 %v67
  %v261 = vunpack.c.l.b16 %v68
  %v262 = vunpack.c.h.b16 %v68
  %v263 = vunpack.c.l.b16 %v69
  %v264 = vunpack.c.h.b16 %v69
  %v265 = vunpack.c.l.b16 %v70
  %v266 = vunpack.c.h.b16 %v70
  %v267 = vunpack.c.l.b16 %v71
  %v268 = vunpack.c.h.b16 %v71
  %v269 = vunpack.c.l.b16 %v72
  %v270 = vunpack.c.h.b16 %v72
  %v271 = vunpack.c.l.b16 %v73
  %v272 = vunpack.c.h.b16 %v73
  %v273 = vunpack.c.l.b16 %v74
  %v274 = vunpack.c.h.b16 %v74
  %v275 = vunpack.c.l.b16 %v75
  %v276 = vunpack.c.h.b16 %v75
  %v277 = vunpack.c.l.b16 %v76
  %v278 = vunpack.c.h.b16 %v76
  %v279 = vunpack.c.l.b16 %v77
  %v280 = vunpack.c.h.b16 %v77
  %v281 = vunpack.c.l.b16 %v78
  %v282 = vunpack.c.h.b16 %v78
  %v283 = vunpack.c.l.b16 %v79
  %v284 = vunpack.c.h.b16 %v79
  %v285 = vunpack.c.l.b16 %v80
  %v286 = vunpack.c.h.b16 %v80
  %v287 = vunpack.c.l.b16 %v81
  %v288 = vunpack.c.h.b16 %v81
  %v289 = vunpack.c.l.b16 %v82
  %v290 = vunpack.c.h.b16 %v82
  %v291 = vunpack.c.l.b16 %v83
  %v292 = vunpack.c.h.b16 %v83
  %v293 = vunpack.c.l.b16 %v84
  %v294 = vunpack.c.h.b16 %v84
  %v295 = vunpack.c.l.b16 %v85
  %v296 = vunpack.c.h.b16 %v85
  %v297 = vunpack.c.l.b16 %v86
  %v298 = vunpack.c.h.b16 %v86
  %v299 = vunpack.c.l.b16 %v87
  %v300 = vunpack.c.h.b16 %v87
  %v301 = vunpack.c.l.b16 %v88
  %v302 = vunpack.c.h.b16 %v88
  %v303 = vunpack.c.l.b16 %v89
  %v304 = vunpack.c.h.b16 %v89
  %v305 = vunpack.c.l.b16 %v90
  %v306 = vunpack.c.h.b16 %v90
  %v307 = vunpack.c.l.b16 %v91
  %v308 = vunpack.c.h.b16 %v91
  %v309 = vunpack.c.l.b16 %v92
  %v310 = vunpack.c.h.b16 %v92
  %v311 = vpack.c.b16 %v185, %v183
  %v312 = vpack.c.b16 %v186, %v184
  %v313 = vpack.c.b16 %v189, %v187
  %v314 = vpack.c.b16 %v190, %v188
  %v315 = vpack.c.b16 %v193, %v191
  %v316 = vpack.c.b16 %v194, %v192
  %v317 = vpack.c.b16 %v197, %v195
  %v318 = vpack.c.b16 %v198, %v196
  %v319 = vpack.c.b16 %v201, %v199
  %v320 = vpack.c.b16 %v202, %v200
  %v321 = vpack.c.b16 %v205, %v203
  %v322 = vpack.c.b16 %v206, %v204
  %v323 = vpack.c.b16 %v209, %v207
  %v324 = vpack.c.b16 %v210, %v208
  %v325 = vpack.c.b16 %v213, %v211
  %v326 = vpack.c.b16 %v214, %v212
  %v327 = vpack.c.b16 %v217, %v215
  %v328 = vpack.c.b16 %v218, %v216
  %v329 = vpack.c.b16 %v221, %v219
  %v330 = vpack.c.b16 %v222, %v220
  %v331 = vpack.c.b16 %v225, %v223
  %v332 = vpack.c.b16 %v226, %v224
  %v333 = vpack.c.b16 %v229, %v227
  %v334 = vpack.c.b16 %v230, %v228
  %v335 = vpack.c.b16 %v233, %v231
  %v336 = vpack.c.b16 %v234, %v232
  %v337 = vpack.c.b16 %v237, %v235
  %v338 = vpack.c.b16 %v238, %v236
  %v339 = vpack.c.b16 %v241, %v239
  %v340 = vpack.c.b16 %v242, %v240
  %v341 = vpack.c.b16 %v245, %v243
  %v342 = vpack.c.b16 %v246, %v244
  %v343 = vpack.c.b16 %v249, %v247
  %v344 = vpack.c.b16 %v250, %v248
  %v345 = vpack.c.b16 %v253, %v251
  %v346 = vpack.c.b16 %v254, %v252
  %v347 = vpack.c.b16 %v257, %v255
  %v348 = vpack.c.b16 %v258, %v256
  %v349 = vpack.c.b16 %v261, %v259
  %v350 = vpack.c.b16 %v262, %v260
  %v351 = vpack.c.b16 %v265, %v263
  %v352 = vpack.c.b16 %v266, %v264
  %v353 = vpack.c.b16 %v269, %v267
  %v354 = vpack.c.b16 %v270, %v268
  %v355 = vpack.c.b16 %v273, %v271
  %v356 = vpack.c.b16 %v274, %v272
  %v357 = vpack.c.b16 %v277, %v275
  %v358 = vpack.c.b16 %v278, %v276
  %v359 = vpack.c.b16 %v281, %v279
  %v360 = vpack.c.b16 %v282, %v280
  %v361 = vpack.c.b16 %v285, %v283
  %v362 = vpack.c.b16 %v286, %v284
  %v363 = vpack.c.b16 %v289, %v287
  %v364 = vpack.c.b16 %v290, %v288
  %v365 = vpack.c.b16 %v293, %v291
  %v366 = vpack.c.b16 %v294, %v292
  %v367 = vpack.c.b16 %v297, %v295
  %v368 = vpack.c.b16 %v298, %v296
  %v369 = vpack.c.b16 %v301, %v299
  %v370 = vpack.c.b16 %v302, %v300
  %v371 = vpack.c.b16 %v305, %v303
  %v372 = vpack.c.b16 %v306, %v304
  %v373 = vpack.c.b16 %v309, %v307
  %v374 = vpack.c.b16 %v310, %v308
  %439 = vmatprep.subr.bf16.mxu0 %v326
  %440 = vmatpush1.bf16.msra.mxu0 %v325
  %441 = vmatprep.subr.bf16.mxu0 %v324
  %442 = vmatpush1.bf16.msra.mxu0 %v323
  %443 = vmatprep.subr.bf16.mxu0 %v322
  %444 = vmatpush1.bf16.msra.mxu0 %v321
  %445 = vmatprep.subr.bf16.mxu0 %v320
  %446 = vmatpush1.bf16.msra.mxu0 %v319
  %447 = vmatprep.subr.bf16.mxu0 %v318
  %448 = vmatpush1.bf16.msra.mxu0 %v317
  %449 = vmatprep.subr.bf16.mxu0 %v316
  %450 = vmatpush1.bf16.msra.mxu0 %v315
  %451 = vmatprep.subr.bf16.mxu0 %v314
  %452 = vmatpush1.bf16.msra.mxu0 %v313
  %453 = vmatprep.subr.bf16.mxu0 %v312
  %454 = vmatpush1.bf16.msra.mxu0 %v311
  %455 = vmatprep.subr.bf16.mxu0 %v342
  %456 = vmatpush2.bf16.msra.mxu0 %v341
  %457 = vmatprep.subr.bf16.mxu0 %v340
  %458 = vmatpush2.bf16.msra.mxu0 %v339
  %459 = vmatprep.subr.bf16.mxu0 %v338
  %460 = vmatpush2.bf16.msra.mxu0 %v337
  %461 = vmatprep.subr.bf16.mxu0 %v336
  %462 = vmatpush2.bf16.msra.mxu0 %v335
  %463 = vmatprep.subr.bf16.mxu0 %v334
  %464 = vmatpush2.bf16.msra.mxu0 %v333
  %465 = vmatprep.subr.bf16.mxu0 %v332
  %466 = vmatpush2.bf16.msra.mxu0 %v331
  %467 = vmatprep.subr.bf16.mxu0 %v330
  %468 = vmatpush2.bf16.msra.mxu0 %v329
  %469 = vmatprep.subr.bf16.mxu0 %v328
  %470 = vmatpush2.bf16.msra.mxu0 %v327
  %471 = vmatprep.mubr.bf16.mxu0 %v112
  %472 = vmatmul.mubr.bf16.gmra.mxu0 %v111
  %v473 = vpop.f32.mrf.mxu0
  %v474 = vadd.f32 %v98, %v473
  %v475 = vpop.f32.mrf.mxu0
  %v476 = vadd.f32 %v102, %v475
  %v477 = vpop.f32.mrf.mxu0
  %v478 = vpop.f32.mrf.mxu0
  %479 = vdwg.mxu0
  %480 = vmatprep.subr.bf16.mxu0 %v358
  %481 = vmatpush1.bf16.msra.mxu0 %v357
  %482 = vmatprep.subr.bf16.mxu0 %v356
  %483 = vmatpush1.bf16.msra.mxu0 %v355
  %484 = vmatprep.subr.bf16.mxu0 %v354
  %485 = vmatpush1.bf16.msra.mxu0 %v353
  %486 = vmatprep.subr.bf16.mxu0 %v352
  %487 = vmatpush1.bf16.msra.mxu0 %v351
  %488 = vmatprep.subr.bf16.mxu0 %v350
  %489 = vmatpush1.bf16.msra.mxu0 %v349
  %490 = vmatprep.subr.bf16.mxu0 %v348
  %491 = vmatpush1.bf16.msra.mxu0 %v347
  %492 = vmatprep.subr.bf16.mxu0 %v346
  %493 = vmatpush1.bf16.msra.mxu0 %v345
  %494 = vmatprep.subr.bf16.mxu0 %v344
  %495 = vmatpush1.bf16.msra.mxu0 %v343
  %496 = vmatprep.subr.bf16.mxu0 %v374
  %497 = vmatpush2.bf16.msra.mxu0 %v373
  %498 = vmatprep.subr.bf16.mxu0 %v372
  %499 = vmatpush2.bf16.msra.mxu0 %v371
  %500 = vmatprep.subr.bf16.mxu0 %v370
  %501 = vmatpush2.bf16.msra.mxu0 %v369
  %502 = vmatprep.subr.bf16.mxu0 %v368
  %503 = vmatpush2.bf16.msra.mxu0 %v367
  %504 = vmatprep.subr.bf16.mxu0 %v366
  %505 = vmatpush2.bf16.msra.mxu0 %v365
  %506 = vmatprep.subr.bf16.mxu0 %v364
  %507 = vmatpush2.bf16.msra.mxu0 %v363
  %508 = vmatprep.subr.bf16.mxu0 %v362
  %509 = vmatpush2.bf16.msra.mxu0 %v361
  %510 = vmatprep.subr.bf16.mxu0 %v360
  %511 = vmatpush2.bf16.msra.mxu0 %v359
  %512 = vmatprep.mubr.bf16.mxu0 %v114
  %513 = vmatmul.mubr.bf16.gmra.mxu0 %v113
  %v514 = vpop.f32.mrf.mxu0
  %v515 = vadd.f32 %v474, %v514
  %v516 = vpop.f32.mrf.mxu0
  %v517 = vadd.f32 %v476, %v516
  %v518 = vpop.f32.mrf.mxu0
  %v519 = vpop.f32.mrf.mxu0
  %520 = vdwg.mxu0
  %v521 = vmax.f32 %v515, 0.0
  %v522 = vmax.f32 %v517, 0.0
  %v523 = vpack.c.bf16 %v521, %v521
  %v524 = vpack.c.bf16 %v522, %v522
  %v525 = vld [vmem:[%s3] sm:$0xf]
  %v526 = vld [vmem:[%s3 + $0x4] sm:$0xf]
  %v527 = vld [vmem:[%s3 + $0x8] sm:$0xf]
  %v528 = vld [vmem:[%s3 + $0xc] sm:$0xf]
  %v529 = vld [vmem:[%s3 + $0x10] sm:$0xf]
  %v530 = vld [vmem:[%s3 + $0x14] sm:$0xf]
  %v531 = vld [vmem:[%s3 + $0x18] sm:$0xf]
  %v532 = vld [vmem:[%s3 + $0x1c] sm:$0xf]
  %v533 = vld [vmem:[%s3 + $0x20] sm:$0xf]
  %v534 = vld [vmem:[%s3 + $0x24] sm:$0xf]
  %v535 = vld [vmem:[%s3 + $0x28] sm:$0xf]
  %v536 = vld [vmem:[%s3 + $0x2c] sm:$0xf]
  %v537 = vld [vmem:[%s3 + $0x30] sm:$0xf]
  %v538 = vld [vmem:[%s3 + $0x34] sm:$0xf]
  %v539 = vld [vmem:[%s3 + $0x38] sm:$0xf]
  %v540 = vld [vmem:[%s3 + $0x3c] sm:$0xf]
  %v541 = vld [vmem:[%s3 + $0x40] sm:$0xf]
  %v542 = vld [vmem:[%s3 + $0x44] sm:$0xf]
  %v543 = vld [vmem:[%s3 + $0x48] sm:$0xf]
  %v544 = vld [vmem:[%s3 + $0x4c] sm:$0xf]
  %v545 = vld [vmem:[%s3 + $0x50] sm:$0xf]
  %v546 = vld [vmem:[%s3 + $0x54] sm:$0xf]
  %v547 = vld [vmem:[%s3 + $0x58] sm:$0xf]
  %v548 = vld [vmem:[%s3 + $0x5c] sm:$0xf]
  %v549 = vld [vmem:[%s3 + $0x60] sm:$0xf]
  %v550 = vld [vmem:[%s3 + $0x64] sm:$0xf]
  %v551 = vld [vmem:[%s3 + $0x68] sm:$0xf]
  %v552 = vld [vmem:[%s3 + $0x6c] sm:$0xf]
  %v553 = vld [vmem:[%s3 + $0x70] sm:$0xf]
  %v554 = vld [vmem:[%s3 + $0x74] sm:$0xf]
  %v555 = vld [vmem:[%s3 + $0x78] sm:$0xf]
  %v556 = vld [vmem:[%s3 + $0x7c] sm:$0xf]
  %v557 = vld [vmem:[%s4] sm:$0x1]
  %v559 = vlaneseq
  %v560 = vshrl.u32 %v559, 7
  %v561 = vsub.s32 0, %v560
  %v562 = vrot.slane %v557, %v561
  %v596 = vunpack.c.l.b16 %v525
  %v597 = vunpack.c.l.b16 %v526
  %v598 = vunpack.c.l.b16 %v527
  %v599 = vunpack.c.l.b16 %v528
  %v600 = vunpack.c.l.b16 %v529
  %v601 = vunpack.c.l.b16 %v530
  %v602 = vunpack.c.l.b16 %v531
  %v603 = vunpack.c.l.b16 %v532
  %v604 = vunpack.c.l.b16 %v533
  %v605 = vunpack.c.l.b16 %v534
  %v606 = vunpack.c.l.b16 %v535
  %v607 = vunpack.c.l.b16 %v536
  %v608 = vunpack.c.l.b16 %v537
  %v609 = vunpack.c.l.b16 %v538
  %v610 = vunpack.c.l.b16 %v539
  %v611 = vunpack.c.l.b16 %v540
  %v612 = vunpack.c.l.b16 %v541
  %v613 = vunpack.c.l.b16 %v542
  %v614 = vunpack.c.l.b16 %v543
  %v615 = vunpack.c.l.b16 %v544
  %v616 = vunpack.c.l.b16 %v545
  %v617 = vunpack.c.l.b16 %v546
  %v618 = vunpack.c.l.b16 %v547
  %v619 = vunpack.c.l.b16 %v548
  %v620 = vunpack.c.l.b16 %v549
  %v621 = vunpack.c.l.b16 %v550
  %v622 = vunpack.c.l.b16 %v551
  %v623 = vunpack.c.l.b16 %v552
  %v624 = vunpack.c.l.b16 %v553
  %v625 = vunpack.c.l.b16 %v554
  %v626 = vunpack.c.l.b16 %v555
  %v627 = vunpack.c.l.b16 %v556
  %v628 = vpack.c.b16 %v597, %v596
  %v629 = vpack.c.b16 %v599, %v598
  %v630 = vpack.c.b16 %v601, %v600
  %v631 = vpack.c.b16 %v603, %v602
  %v632 = vpack.c.b16 %v605, %v604
  %v633 = vpack.c.b16 %v607, %v606
  %v634 = vpack.c.b16 %v609, %v608
  %v635 = vpack.c.b16 %v611, %v610
  %v636 = vpack.c.b16 %v613, %v612
  %v637 = vpack.c.b16 %v615, %v614
  %v638 = vpack.c.b16 %v617, %v616
  %v639 = vpack.c.b16 %v619, %v618
  %v640 = vpack.c.b16 %v621, %v620
  %v641 = vpack.c.b16 %v623, %v622
  %v642 = vpack.c.b16 %v625, %v624
  %v643 = vpack.c.b16 %v627, %v626
  %660 = vmatprep.subr.bf16.mxu0 0
  %661 = vmatpush1.bf16.msra.mxu0 %v635
  %662 = vmatprep.subr.bf16.mxu0 0
  %663 = vmatpush1.bf16.msra.mxu0 %v634
  %664 = vmatprep.subr.bf16.mxu0 0
  %665 = vmatpush1.bf16.msra.mxu0 %v633
  %666 = vmatprep.subr.bf16.mxu0 0
  %667 = vmatpush1.bf16.msra.mxu0 %v632
  %668 = vmatprep.subr.bf16.mxu0 0
  %669 = vmatpush1.bf16.msra.mxu0 %v631
  %670 = vmatprep.subr.bf16.mxu0 0
  %671 = vmatpush1.bf16.msra.mxu0 %v630
  %672 = vmatprep.subr.bf16.mxu0 0
  %673 = vmatpush1.bf16.msra.mxu0 %v629
  %674 = vmatprep.subr.bf16.mxu0 0
  %675 = vmatpush1.bf16.msra.mxu0 %v628
  %676 = vmatprep.subr.bf16.mxu0 0
  %677 = vmatpush2.bf16.msra.mxu0 %v643
  %678 = vmatprep.subr.bf16.mxu0 0
  %679 = vmatpush2.bf16.msra.mxu0 %v642
  %680 = vmatprep.subr.bf16.mxu0 0
  %681 = vmatpush2.bf16.msra.mxu0 %v641
  %682 = vmatprep.subr.bf16.mxu0 0
  %683 = vmatpush2.bf16.msra.mxu0 %v640
  %684 = vmatprep.subr.bf16.mxu0 0
  %685 = vmatpush2.bf16.msra.mxu0 %v639
  %686 = vmatprep.subr.bf16.mxu0 0
  %687 = vmatpush2.bf16.msra.mxu0 %v638
  %688 = vmatprep.subr.bf16.mxu0 0
  %689 = vmatpush2.bf16.msra.mxu0 %v637
  %690 = vmatprep.subr.bf16.mxu0 0
  %691 = vmatpush2.bf16.msra.mxu0 %v636
  %692 = vmatprep.mubr.bf16.mxu0 %v524
  %693 = vmatmul.mubr.bf16.gmra.mxu0 %v523
  %v694 = vpop.f32.mrf.mxu0
  %v695 = vadd.f32 %v562, %v694
  %v696 = vpop.f32.mrf.mxu0
  %v697 = vpop.f32.mrf.mxu0
  %v698 = vpop.f32.mrf.mxu0
  %699 = vdwg.mxu0
  %v700 = vmax.f32 %v695, 0.0
  %v701 = vpack.c.bf16 %v700, %v700
  %v702 = vld [vmem:[%s5] sm:$0xff]
  %v703 = vld [vmem:[%s5 + $0x8] sm:$0xff]
  %v704 = vld [vmem:[%s5 + $0x10] sm:$0xff]
  %v705 = vld [vmem:[%s5 + $0x18] sm:$0xff]
  %v706 = vld [vmem:[%s5 + $0x20] sm:$0xff]
  %v707 = vld [vmem:[%s5 + $0x28] sm:$0xff]
  %v708 = vld [vmem:[%s5 + $0x30] sm:$0xff]
  %v709 = vld [vmem:[%s5 + $0x38] sm:$0xff]
  %v710 = vld [vmem:[%s5 + $0x40] sm:$0xff]
  %v711 = vld [vmem:[%s5 + $0x48] sm:$0xff]
  %v712 = vld [vmem:[%s5 + $0x50] sm:$0xff]
  %v713 = vld [vmem:[%s5 + $0x58] sm:$0xff]
  %v714 = vld [vmem:[%s5 + $0x60] sm:$0xff]
  %v715 = vld [vmem:[%s5 + $0x68] sm:$0xff]
  %v716 = vld [vmem:[%s5 + $0x70] sm:$0xff]
  %v717 = vld [vmem:[%s5 + $0x78] sm:$0xff]
  %v718 = vld [vmem:[%s6] sm:$0x3]
  %v720 = vlaneseq
  %v721 = vshrl.u32 %v720, 7
  %v722 = vsub.s32 0, %v721
  %v723 = vrot.slane %v718, %v722
  %v724 = vlaneseq
  %v725 = vshrl.u32 %v724, 7
  %v726 = vsub.s32 1, %v725
  %v727 = vrot.slane %v718, %v726
  %v746 = vunpack.c.l.b16 %v702
  %v747 = vunpack.c.h.b16 %v702
  %v748 = vunpack.c.l.b16 %v703
  %v749 = vunpack.c.h.b16 %v703
  %v750 = vunpack.c.l.b16 %v704
  %v751 = vunpack.c.h.b16 %v704
  %v752 = vunpack.c.l.b16 %v705
  %v753 = vunpack.c.h.b16 %v705
  %v754 = vunpack.c.l.b16 %v706
  %v755 = vunpack.c.h.b16 %v706
  %v756 = vunpack.c.l.b16 %v707
  %v757 = vunpack.c.h.b16 %v707
  %v758 = vunpack.c.l.b16 %v708
  %v759 = vunpack.c.h.b16 %v708
  %v760 = vunpack.c.l.b16 %v709
  %v761 = vunpack.c.h.b16 %v709
  %v762 = vunpack.c.l.b16 %v710
  %v763 = vunpack.c.h.b16 %v710
  %v764 = vunpack.c.l.b16 %v711
  %v765 = vunpack.c.h.b16 %v711
  %v766 = vunpack.c.l.b16 %v712
  %v767 = vunpack.c.h.b16 %v712
  %v768 = vunpack.c.l.b16 %v713
  %v769 = vunpack.c.h.b16 %v713
  %v770 = vunpack.c.l.b16 %v714
  %v771 = vunpack.c.h.b16 %v714
  %v772 = vunpack.c.l.b16 %v715
  %v773 = vunpack.c.h.b16 %v715
  %v774 = vunpack.c.l.b16 %v716
  %v775 = vunpack.c.h.b16 %v716
  %v776 = vunpack.c.l.b16 %v717
  %v777 = vunpack.c.h.b16 %v717
  %v778 = vpack.c.b16 %v748, %v746
  %v779 = vpack.c.b16 %v749, %v747
  %v780 = vpack.c.b16 %v752, %v750
  %v781 = vpack.c.b16 %v753, %v751
  %v782 = vpack.c.b16 %v756, %v754
  %v783 = vpack.c.b16 %v757, %v755
  %v784 = vpack.c.b16 %v760, %v758
  %v785 = vpack.c.b16 %v761, %v759
  %v786 = vpack.c.b16 %v764, %v762
  %v787 = vpack.c.b16 %v765, %v763
  %v788 = vpack.c.b16 %v768, %v766
  %v789 = vpack.c.b16 %v769, %v767
  %v790 = vpack.c.b16 %v772, %v770
  %v791 = vpack.c.b16 %v773, %v771
  %v792 = vpack.c.b16 %v776, %v774
  %v793 = vpack.c.b16 %v777, %v775
  %810 = vmatprep.subr.bf16.mxu0 %v793
  %811 = vmatpush1.bf16.msra.mxu0 %v792
  %812 = vmatprep.subr.bf16.mxu0 %v791
  %813 = vmatpush1.bf16.msra.mxu0 %v790
  %814 = vmatprep.subr.bf16.mxu0 %v789
  %815 = vmatpush1.bf16.msra.mxu0 %v788
  %816 = vmatprep.subr.bf16.mxu0 %v787
  %817 = vmatpush1.bf16.msra.mxu0 %v786
  %818 = vmatprep.subr.bf16.mxu0 %v785
  %819 = vmatpush1.bf16.msra.mxu0 %v784
  %820 = vmatprep.subr.bf16.mxu0 %v783
  %821 = vmatpush1.bf16.msra.mxu0 %v782
  %822 = vmatprep.subr.bf16.mxu0 %v781
  %823 = vmatpush1.bf16.msra.mxu0 %v780
  %824 = vmatprep.subr.bf16.mxu0 %v779
  %825 = vmatpush1.bf16.msra.mxu0 %v778
  %826 = vmatprep.subr.bf16.mxu0 0
  %827 = vmatpush2.bf16.msra.mxu0 0
  %828 = vmatprep.subr.bf16.mxu0 0
  %829 = vmatpush2.bf16.msra.mxu0 0
  %830 = vmatprep.subr.bf16.mxu0 0
  %831 = vmatpush2.bf16.msra.mxu0 0
  %832 = vmatprep.subr.bf16.mxu0 0
  %833 = vmatpush2.bf16.msra.mxu0 0
  %834 = vmatprep.subr.bf16.mxu0 0
  %835 = vmatpush2.bf16.msra.mxu0 0
  %836 = vmatprep.subr.bf16.mxu0 0
  %837 = vmatpush2.bf16.msra.mxu0 0
  %838 = vmatprep.subr.bf16.mxu0 0
  %839 = vmatpush2.bf16.msra.mxu0 0
  %840 = vmatprep.subr.bf16.mxu0 0
  %841 = vmatpush2.bf16.msra.mxu0 0
  %842 = vmatprep.mubr.bf16.mxu0 0
  %843 = vmatmul.mubr.bf16.gmra.mxu0 %v701
  %v844 = vpop.f32.mrf.mxu0
  %v845 = vadd.f32 %v723, %v844
  %v846 = vpop.f32.mrf.mxu0
  %v847 = vadd.f32 %v727, %v846
  %v848 = vpop.f32.mrf.mxu0
  %v849 = vpop.f32.mrf.mxu0
  %850 = vdwg.mxu0
  %v851 = vmax.f32 %v845, 0.0
  %v852 = vmax.f32 %v847, 0.0
  %v853 = vpack.c.bf16 %v851, %v851
  %v854 = vpack.c.bf16 %v852, %v852
  %v857 = vunpack.c.l.b16 %v853
  %v858 = vunpack.c.l.b16 %v854
  %v859 = vpack.c.b16 %v858, %v857
  %861 = vst [vmem:[%s7] sm:$0xff] %v859
  // Predicated region
  $region30: #{encoder_forward.1} parent=0 // pred_check
    _
  $region31: #{encoder_forward.1} parent=0 // pred_check_branch
    %863 = sbr.rel (0) target = $region33
  $region32: #{encoder_forward.1} parent=0 // pred_region
    _
  $region33: #{encoder_forward.1} parent=0 // pred_fallthru
    _
  // Predicated region
  $region34: #{encoder_forward.1} parent=0 // pred_check
    _
  $region35: #{encoder_forward.1} parent=0 // pred_check_branch
    %865 = sbr.rel (0) target = $region37
  $region36: #{encoder_forward.1} parent=0 // pred_region
    _
  $region37: #{encoder_forward.1} parent=0 // pred_fallthru
    _

</llo_original>
